<compile_context>
chip_gen: v6e
topology: v6e:2x2x1
jax: 0.10.0
libtpu: 0.0.40
codegen_flags: <defaults>
</compile_context>

<pallas_src>
import functools
import math

import numpy as np
import jax
import jax.numpy as jnp
from jax import lax
from jax.experimental import pallas as pl
from jax.experimental.pallas import tpu as pltpu


_EPS = 1e-12  # matches torch.nn.functional.normalize default eps


def _round_up(x, m):
    return ((x + m - 1) // m) * m


def _l2_normalize_rows(w):
    """Row-wise L2 normalization in f32 (wrapper-side, done once per weight)."""
    w = w.astype(jnp.float32)
    inv = lax.rsqrt(jnp.maximum(jnp.sum(w * w, axis=-1, keepdims=True), _EPS * _EPS))
    return w * inv


def _cosine_kernel(x_ref, wn_ref, o_ref, *, compute_dtype):
    # x_ref : (TB, K_pad)     one batch tile, un-normalized, f32
    # wn_ref: (O_pad, K_pad)  pre-normalized weights, already in compute_dtype
    x = x_ref[...].astype(jnp.float32)
    # L2-normalize x rows in-kernel (VALU square, XLU lane-reduce, EUP rsqrt).
    x_inv = lax.rsqrt(jnp.maximum(jnp.sum(x * x, axis=-1, keepdims=True), _EPS * _EPS))
    xn = (x * x_inv).astype(compute_dtype)

    # cosine = xn @ wn.T, contracting the last dims of BOTH operands so no
    # transpose is materialized in the kernel.
    out = lax.dot_general(
        xn,
        wn_ref[...],
        dimension_numbers=(((1,), (1,)), ((), ())),
        preferred_element_type=jnp.float32,
    )
    o_ref[...] = out.astype(o_ref.dtype)


def cosine_similarity_matmul(x, w_norm, *, compute_dtype=jnp.bfloat16, batch_tile=512):
    """normalize(x, dim=1) @ w_norm.T with w_norm already row-normalized.

    x: (B, K) float32, w_norm: (O, K) pre-normalized (PyTorch layout). Returns (B, O) f32.
    """
    B, K = x.shape
    O, K2 = w_norm.shape
    assert K == K2, "in_features mismatch"

    K_pad = _round_up(K, 128)   # lane-dense contraction dim
    O_pad = _round_up(O, 128)   # lane-dense output (unmasked vst)

    # Pad the contraction dim only when needed (zero K-columns don't perturb
    # norms or dots); the common K=512/1024/2048 case does NOT copy x.
    if K_pad != K:
        x = jnp.pad(x, ((0, 0), (0, K_pad - K)))
    if (O_pad, K_pad) != (O, K):
        w_norm = jnp.pad(w_norm, ((0, O_pad - O), (0, K_pad - K)))
    w_norm = w_norm.astype(compute_dtype)   # MXU operand dtype, cast once

    x_itemsize = x.dtype.itemsize
    w_bytes = O_pad * K_pad * np.dtype(compute_dtype).itemsize   # single-buffered

    def vmem_estimate(tb):
        # weight (1 buffer) + x tiles (2 buffers) + f32 output tiles (2 buffers)
        return w_bytes + 2 * tb * K_pad * x_itemsize + 2 * tb * O_pad * 4

    # Pick the largest batch tile that fits a conservative budget (fits v7x too).
    budget = 48 << 20
    TB = max(8, _round_up(min(batch_tile, _round_up(B, 8)), 8))
    while TB > 8 and vmem_estimate(TB) > budget:
        TB = max(8, _round_up(TB // 2, 8))

    vmem_limit = int(vmem_estimate(TB) * 1.25) + (2 << 20)
    vmem_limit = max(32 << 20, min(vmem_limit, 96 << 20))

    num_tiles = pl.cdiv(B, TB)  # ragged last tile: OOB rows dropped on write

    out = pl.pallas_call(
        functools.partial(_cosine_kernel, compute_dtype=compute_dtype),
        out_shape=jax.ShapeDtypeStruct((B, O_pad), jnp.float32),
        grid=(num_tiles,),
        in_specs=[
            pl.BlockSpec((TB, K_pad), lambda i: (i, 0)),
            # Constant block index -> weight stays VMEM-resident across batch
            # tiles; one buffer is enough since it never changes.
            pl.BlockSpec((O_pad, K_pad), lambda i: (0, 0),
                         pipeline_mode=pl.Buffered(1)),
        ],
        out_specs=pl.BlockSpec((TB, O_pad), lambda i: (i, 0)),
        compiler_params=pltpu.CompilerParams(
            dimension_semantics=("parallel",),   # megacore-split the batch
            vmem_limit_bytes=vmem_limit,
        ),
    )(x, w_norm)

    return out[:, :O]


def reduce_proxies(out, nb_proxy):
    """Same as the PyTorch helper: softmax-weighted sum over the proxy axis."""
    if nb_proxy == 1:
        return out
    bs, width = out.shape
    assert width % nb_proxy == 0, "Shape error"
    nb_classes = width // nb_proxy
    simi = out.reshape(bs, nb_classes, nb_proxy)
    attn = jax.nn.softmax(simi, axis=-1)
    return jnp.sum(attn * simi, axis=-1)


def split_cosine_linear(x, w1, w2, sigma=None, *, nb_proxy=1,
                        compute_dtype=jnp.bfloat16):
    """Forward of SplitCosineLinear.

    w1: (out_features1 * nb_proxy, K), w2: (out_features2 * nb_proxy, K),
    sigma: scalar or None.
    """
    o1 = w1.shape[0]
    assert o1 % nb_proxy == 0 and w2.shape[0] % nb_proxy == 0, "Shape error"

    # Normalize + concatenate both heads ONCE in the wrapper (XLA fuses this
    # with the pad/cast); the kernel receives ready-to-use MXU weights.
    w_norm = jnp.concatenate([_l2_normalize_rows(w1), _l2_normalize_rows(w2)], axis=0)
    cos = cosine_similarity_matmul(x, w_norm, compute_dtype=compute_dtype)

    # reduce_proxies(cat(out1, out2)) == cat(reduce_proxies(out1), reduce_proxies(out2)),
    # so a single proxy reduction + slices yields logits/old_scores/new_scores.
    reduced = reduce_proxies(cos, nb_proxy)
    c1 = o1 // nb_proxy
    old_scores = reduced[:, :c1]
    new_scores = reduced[:, c1:]
    logits = sigma * reduced if sigma is not None else reduced
    return {"old_scores": old_scores, "new_scores": new_scores, "logits": logits}


def _reference(x, w1, w2, sigma, nb_proxy):
    """Pure-JAX f32 reference mirroring the PyTorch module."""
    def norm(a):
        n = jnp.sqrt(jnp.sum(a * a, axis=1, keepdims=True))
        return a / jnp.maximum(n, _EPS)

    xn = norm(x)
    o1 = xn @ norm(w1).T
    o2 = xn @ norm(w2).T
    out = jnp.concatenate([o1, o2], axis=1)
    out = reduce_proxies(out, nb_proxy)
    if sigma is not None:
        out = sigma * out
    return {
        "old_scores": reduce_proxies(o1, nb_proxy),
        "new_scores": reduce_proxies(o2, nb_proxy),
        "logits": out,
    }


if __name__ == "__main__":
    def check(out, ref, atol, rtol, tag):
        for k in ("old_scores", "new_scores", "logits"):
            assert out[k].shape == ref[k].shape, f"{tag} shape mismatch: {k}"
            assert jnp.allclose(out[k], ref[k], atol=atol, rtol=rtol), f"{tag} mismatch: {k}"

    key = jax.random.PRNGKey(0)

    # Config 1: small shapes, K needs lane padding, nb_proxy=2, sigma != 1.
    batch, in_features = 8, 32
    out_features1, out_features2 = 10, 6
    nb_proxy = 2
    kx, k1, k2, key = jax.random.split(key, 4)
    stdv = 1.0 / math.sqrt(in_features)          # CosineLinear.reset_parameters
    x = jax.random.normal(kx, (batch, in_features), dtype=jnp.float32)
    w1 = jax.random.uniform(k1, (out_features1 * nb_proxy, in_features),
                            minval=-stdv, maxval=stdv, dtype=jnp.float32)
    w2 = jax.random.uniform(k2, (out_features2 * nb_proxy, in_features),
                            minval=-stdv, maxval=stdv, dtype=jnp.float32)
    sigma = jnp.float32(1.5)
    ref = _reference(x, w1, w2, sigma, nb_proxy)

    out_f32 = split_cosine_linear(x, w1, w2, sigma, nb_proxy=nb_proxy,
                                  compute_dtype=jnp.float32)
    jax.block_until_ready(out_f32["logits"])
    check(out_f32, ref, 1e-5, 1e-5, "cfg1-f32")

    out_bf16 = split_cosine_linear(x, w1, w2, sigma, nb_proxy=nb_proxy)
    jax.block_until_ready(out_bf16["logits"])
    check(out_bf16, ref, 2e-2, 2e-2, "cfg1-bf16")

    # Config 2: K already a 128 multiple (no x pad copy) and a ragged batch
    # (B not a multiple of the batch tile -> OOB rows dropped on write).
    batch, in_features = 13, 128
    out_features1, out_features2 = 5, 3
    nb_proxy = 1
    kx, k1, k2, key = jax.random.split(key, 4)
    stdv = 1.0 / math.sqrt(in_features)
    x = jax.random.normal(kx, (batch, in_features), dtype=jnp.float32)
    w1 = jax.random.uniform(k1, (out_features1, in_features),
                            minval=-stdv, maxval=stdv, dtype=jnp.float32)
    w2 = jax.random.uniform(k2, (out_features2, in_features),
                            minval=-stdv, maxval=stdv, dtype=jnp.float32)
    ref = _reference(x, w1, w2, None, nb_proxy)

    out_r = split_cosine_linear(x, w1, w2, None, nb_proxy=nb_proxy,
                                compute_dtype=jnp.float32)
    jax.block_until_ready(out_r["logits"])
    check(out_r, ref, 1e-5, 1e-5, "cfg2-f32")

    print("KERNEL_OK")
</pallas_src>

<mosaic_0001>
module attributes {stable_mosaic.version = 11 : i64} {
  func.func @_cosine_kernel(%arg0: i32, %arg1: memref<8x128xf32, #tpu.memory_space<vmem>>, %arg2: memref<128x128xf32, #tpu.memory_space<vmem>>, %arg3: memref<8x128xf32, #tpu.memory_space<vmem>>) attributes {dimension_semantics = [#tpu.dimension_semantics<parallel>], iteration_bounds = array<i64: 1>, scalar_prefetch = 0 : i64, scratch_operands = 0 : i64, tpu.core_type = #tpu.core_type<tc>, window_params = [{transform_indices = @transform_0, window_bounds = array<i64: 8, 128>}, {pipeline_mode = #tpu.pipeline_mode<synchronous>, transform_indices = @transform_1, window_bounds = array<i64: 128, 128>}, {transform_indices = @transform_2, window_bounds = array<i64: 8, 128>}]} {
    %c0 = arith.constant 0 : index
    %c0_0 = arith.constant 0 : index
    %0 = vector.load %arg1[%c0, %c0_0] : memref<8x128xf32, #tpu.memory_space<vmem>>, vector<8x128xf32>
    %1 = arith.mulf %0, %0 : vector<8x128xf32>
    %cst = arith.constant dense<0.000000e+00> : vector<8xf32>
    %2 = vector.multi_reduction <add>, %1, %cst [1] : vector<8x128xf32> to vector<8xf32>
    %3 = vector.shape_cast %2 : vector<8xf32> to vector<8x1xf32>
    %cst_1 = arith.constant 1.000000e-24 : f32
    %4 = vector.broadcast %cst_1 : f32 to vector<8x1xf32>
    %5 = arith.maximumf %3, %4 : vector<8x1xf32>
    %6 = math.rsqrt %5 : vector<8x1xf32>
    %7 = vector.broadcast %6 : vector<8x1xf32> to vector<8x128xf32>
    %8 = arith.mulf %0, %7 : vector<8x128xf32>
    %c0_2 = arith.constant 0 : index
    %c0_3 = arith.constant 0 : index
    %9 = vector.load %arg2[%c0_2, %c0_3] : memref<128x128xf32, #tpu.memory_space<vmem>>, vector<128x128xf32>
    %cst_4 = arith.constant dense<0.000000e+00> : vector<8x128xf32>
    %10 = tpu.matmul %8, %9, %cst_4 {dimension_numbers = #tpu.dot_dimension_numbers<[1], [1], [0], [0], [0, 0, 1, 0], [], []>} : vector<8x128xf32>, vector<128x128xf32>, vector<8x128xf32> -> vector<8x128xf32>
    %c0_5 = arith.constant 0 : index
    %c0_6 = arith.constant 0 : index
    %11 = vector.load %arg3[%c0_5, %c0_6] : memref<8x128xf32, #tpu.memory_space<vmem>>, vector<8x128xf32>
    tpu.vector_store %arg3[%c0_5, %c0_6], %10 {strides = array<i32>} : memref<8x128xf32, #tpu.memory_space<vmem>>, vector<8x128xf32>,
    return
  }
  func.func @transform_0(%arg0: i32) -> (i32, i32) {
    %c0_i32 = arith.constant 0 : i32
    %c0_i32_0 = arith.constant 0 : i32
    return %arg0, %c0_i32 : i32, i32
  }
  func.func @transform_1(%arg0: i32) -> (i32, i32) {
    %c0_i32 = arith.constant 0 : i32
    %c0_i32_0 = arith.constant 0 : i32
    %c0_i32_1 = arith.constant 0 : i32
    return %c0_i32, %c0_i32_0 : i32, i32
  }
  func.func @transform_2(%arg0: i32) -> (i32, i32) {
    %c0_i32 = arith.constant 0 : i32
    %c0_i32_0 = arith.constant 0 : i32
    return %arg0, %c0_i32 : i32, i32
  }
}

</mosaic_0001>

<llo_original>
// kernel: tpu_custom_call.1
$region0: #{tpu_custom_call.1}
  #allocation0 [shape = 'u32[]', space=smem, size = 0x4, offset = 0x4, fixed_abs, tag = 'smem constant byte address 0x4 - core index']
  #allocation1 [shape = 'u32[144,128]{1,0:T(1,128)}', space=vmem, size = 0x12000, scoped, tag = 'internal scratch']
  %s0 = inlined_call_operand.hbm [shape: f32[8,128], index: 0, kind: input, shape index: {}]
  %s1 = inlined_call_operand.hbm [shape: f32[128,128], index: 1, kind: input, shape index: {}]
  %s2 = inlined_call_operand.hbm [shape: f32[8,128], index: 2, kind: output, shape index: {}]
  %s3 = sld [smem:[#allocation0]]
  $region26: #{tpu_custom_call.1} parent=0
    _
  %s5 = ssub.s32 1, %s3
  %s6 = scalar_select 0, %s5, %s3
  $region1: #{tpu_custom_call.1} parent=0
    #allocation2 [shape = 'u8[4096]{0}', space=vmem, size = 0x1000, scoped, tag = 'input window, operand 0, single buffered']
    #allocation3 [shape = 's32[1]{0}', space=sflag, size = 0x4, scoped, tag = 'scoped memory for tpu_custom_call.1']
    #allocation4 [shape = 's32[1]{0}', space=sflag, size = 0x4, scoped, tag = 'scoped memory for tpu_custom_call.1']
    #allocation5 [shape = 'u8[65536]{0}', space=vmem, size = 0x10000, scoped, tag = 'input window, operand 1, single buffered']
    #allocation6 [shape = 's32[1]{0}', space=sflag, size = 0x4, scoped, tag = 'scoped memory for tpu_custom_call.1']
    #allocation7 [shape = 'u8[4096]{0}', space=vmem, size = 0x1000, scoped, tag = 'output window, operand 0, single buffered']
    %7 = vsyncpa [#allocation3], 0
    %8 = vsyncpa [#allocation6], 0
    %9 = vsyncpa [#allocation4], 0
    // Predicated region
    $region2: #{tpu_custom_call.1} parent=1 // pred_check
      _
    $region3: #{tpu_custom_call.1} parent=1 // pred_check_branch
      %11 = sbr.rel (0) target = $region5
    $region4: #{tpu_custom_call.1} parent=1 // pred_region
      %s13 = ssub.s32 128, 128
      %14 = vsyncadd [#allocation3], %s13
      %s16 = sshll.u32 [#allocation2], 4
      %s17 = int_to_ptr.vmem [resolvable:$true] %s16
      %19 = dma.hbm_to_vmem [thread:$0]  %s0, 128, %s17, [#allocation3]
    $region5: #{tpu_custom_call.1} parent=1 // pred_fallthru
      _
    // Predicated region
    $region6: #{tpu_custom_call.1} parent=1 // pred_check
      _
    $region7: #{tpu_custom_call.1} parent=1 // pred_check_branch
      %21 = sbr.rel (0) target = $region9
    $region8: #{tpu_custom_call.1} parent=1 // pred_region
      %s23 = ssub.s32 2048, 2048
      %24 = vsyncadd [#allocation6], %s23
      %s25 = sshll.u32 [#allocation5], 4
      %s26 = int_to_ptr.vmem [resolvable:$true] %s25
      %31 = dma.hbm_to_vmem [thread:$0]  %s1, 2048, %s26, [#allocation6], 128, 128, 8
    $region9: #{tpu_custom_call.1} parent=1 // pred_fallthru
      _
    // Predicated region
    $region10: #{tpu_custom_call.1} parent=1 // pred_check
      _
    $region11: #{tpu_custom_call.1} parent=1 // pred_check_branch
      %33 = sbr.rel (0) target = $region13
    $region12: #{tpu_custom_call.1} parent=1 // pred_region
      %34 = dma.done [#allocation3], 128
    $region13: #{tpu_custom_call.1} parent=1 // pred_fallthru
      _
    // Predicated region
    $region14: #{tpu_custom_call.1} parent=1 // pred_check
      _
    $region15: #{tpu_custom_call.1} parent=1 // pred_check_branch
      %36 = sbr.rel (0) target = $region17
    $region16: #{tpu_custom_call.1} parent=1 // pred_region
      %37 = dma.done [#allocation6], 2048
    $region17: #{tpu_custom_call.1} parent=1 // pred_fallthru
      _
    %v38 = vld [vmem:[#allocation2] sm:$0xff]
    %v39 = vmul.f32 %v38, %v38
    %40 = vadd.xlane.f32.xlu0 %v39
    %v41 = vpop.xlane.xlu0 %40
    %v42 = vmax.f32 %v41, 1e-24
    %v43 = vrsqrt.pop %v42
    %v44 = vmul.f32 %v38, %v43
    %v45 = vld [vmem:[#allocation5] sm:$0xff]
    %v46 = vld [vmem:[#allocation5 + $0x8] sm:$0xff]
    %v47 = vld [vmem:[#allocation5 + $0x10] sm:$0xff]
    %v48 = vld [vmem:[#allocation5 + $0x18] sm:$0xff]
    %v49 = vld [vmem:[#allocation5 + $0x20] sm:$0xff]
    %v50 = vld [vmem:[#allocation5 + $0x28] sm:$0xff]
    %v51 = vld [vmem:[#allocation5 + $0x30] sm:$0xff]
    %v52 = vld [vmem:[#allocation5 + $0x38] sm:$0xff]
    %v53 = vld [vmem:[#allocation5 + $0x40] sm:$0xff]
    %v54 = vld [vmem:[#allocation5 + $0x48] sm:$0xff]
    %v55 = vld [vmem:[#allocation5 + $0x50] sm:$0xff]
    %v56 = vld [vmem:[#allocation5 + $0x58] sm:$0xff]
    %v57 = vld [vmem:[#allocation5 + $0x60] sm:$0xff]
    %v58 = vld [vmem:[#allocation5 + $0x68] sm:$0xff]
    %v59 = vld [vmem:[#allocation5 + $0x70] sm:$0xff]
    %v60 = vld [vmem:[#allocation5 + $0x78] sm:$0xff]
    %61 = vmatprep.subr.mxu0 0.0
    %62 = vmatpush1.xpose.msra.mxu0 %v60
    %63 = vmatprep.subr.mxu0 0.0
    %64 = vmatpush1.xpose.msra.mxu0 %v59
    %65 = vmatprep.subr.mxu0 0.0
    %66 = vmatpush1.xpose.msra.mxu0 %v58
    %67 = vmatprep.subr.mxu0 0.0
    %68 = vmatpush1.xpose.msra.mxu0 %v57
    %69 = vmatprep.subr.mxu0 0.0
    %70 = vmatpush1.xpose.msra.mxu0 %v56
    %71 = vmatprep.subr.mxu0 0.0
    %72 = vmatpush1.xpose.msra.mxu0 %v55
    %73 = vmatprep.subr.mxu0 0.0
    %74 = vmatpush1.xpose.msra.mxu0 %v54
    %75 = vmatprep.subr.mxu0 0.0
    %76 = vmatpush1.xpose.msra.mxu0 %v53
    %77 = vmatprep.subr.mxu0 0.0
    %78 = vmatpush1.xpose.msra.mxu0 %v52
    %79 = vmatprep.subr.mxu0 0.0
    %80 = vmatpush1.xpose.msra.mxu0 %v51
    %81 = vmatprep.subr.mxu0 0.0
    %82 = vmatpush1.xpose.msra.mxu0 %v50
    %83 = vmatprep.subr.mxu0 0.0
    %84 = vmatpush1.xpose.msra.mxu0 %v49
    %85 = vmatprep.subr.mxu0 0.0
    %86 = vmatpush1.xpose.msra.mxu0 %v48
    %87 = vmatprep.subr.mxu0 0.0
    %88 = vmatpush1.xpose.msra.mxu0 %v47
    %89 = vmatprep.subr.mxu0 0.0
    %90 = vmatpush1.xpose.msra.mxu0 %v46
    %91 = vmatprep.subr.mxu0 0.0
    %92 = vmatpush1.xpose.msra.mxu0 %v45
    %93 = vmatprep.subr.mxu0 0.0
    %94 = vmatpush2.xpose.msra.mxu0 0.0
    %95 = vmatprep.subr.mxu0 0.0
    %96 = vmatpush2.xpose.msra.mxu0 0.0
    %97 = vmatprep.subr.mxu0 0.0
    %98 = vmatpush2.xpose.msra.mxu0 0.0
    %99 = vmatprep.subr.mxu0 0.0
    %100 = vmatpush2.xpose.msra.mxu0 0.0
    %101 = vmatprep.subr.mxu0 0.0
    %102 = vmatpush2.xpose.msra.mxu0 0.0
    %103 = vmatprep.subr.mxu0 0.0
    %104 = vmatpush2.xpose.msra.mxu0 0.0
    %105 = vmatprep.subr.mxu0 0.0
    %106 = vmatpush2.xpose.msra.mxu0 0.0
    %107 = vmatprep.subr.mxu0 0.0
    %108 = vmatpush2.xpose.msra.mxu0 0.0
    %109 = vmatprep.subr.mxu0 0.0
    %110 = vmatpush2.xpose.msra.mxu0 0.0
    %111 = vmatprep.subr.mxu0 0.0
    %112 = vmatpush2.xpose.msra.mxu0 0.0
    %113 = vmatprep.subr.mxu0 0.0
    %114 = vmatpush2.xpose.msra.mxu0 0.0
    %115 = vmatprep.subr.mxu0 0.0
    %116 = vmatpush2.xpose.msra.mxu0 0.0
    %117 = vmatprep.subr.mxu0 0.0
    %118 = vmatpush2.xpose.msra.mxu0 0.0
    %119 = vmatprep.subr.mxu0 0.0
    %120 = vmatpush2.xpose.msra.mxu0 0.0
    %121 = vmatprep.subr.mxu0 0.0
    %122 = vmatpush2.xpose.msra.mxu0 0.0
    %123 = vmatprep.subr.mxu0 0.0
    %124 = vmatpush2.xpose.msra.mxu0 0.0
    %125 = vmatprep.mubr.f32.mxu0 0.0
    %126 = vmatmul.mubr.f32.gmra.mxu0 %v44
    %v127 = vpop.f32.mrf.mxu0
    %v128 = vadd.f32 0.0, %v127
    %v129 = vpop.f32.mrf.mxu0
    %130 = vdwg.mxu0
    %131 = vst [vmem:[#allocation7] sm:$0xff] %v128
    // Predicated region
    $region18: #{tpu_custom_call.1} parent=1 // pred_check
      _
    $region19: #{tpu_custom_call.1} parent=1 // pred_check_branch
      %133 = sbr.rel (0) target = $region21
    $region20: #{tpu_custom_call.1} parent=1 // pred_region
      %s135 = ssub.s32 128, 128
      %136 = vsyncadd [#allocation4], %s135
      %s138 = sshll.u32 [#allocation7], 4
      %s139 = int_to_ptr.vmem [resolvable:$true] %s138
      %141 = dma.vmem_to_hbm [thread:$0]  %s139, 128, %s2, [#allocation4]
    $region21: #{tpu_custom_call.1} parent=1 // pred_fallthru
      _
    // Predicated region
    $region22: #{tpu_custom_call.1} parent=1 // pred_check
      _
    $region23: #{tpu_custom_call.1} parent=1 // pred_check_branch
      %143 = sbr.rel (0) target = $region25
    $region24: #{tpu_custom_call.1} parent=1 // pred_region
      %144 = dma.done [#allocation4], 128
    $region25: #{tpu_custom_call.1} parent=1 // pred_fallthru
      _
    %145 = vsyncpa [#allocation3], 1
    %146 = vsyncpa [#allocation6], 1
    %147 = vsyncpa [#allocation4], 1

</llo_original>
